<compile_context>
chip_gen: v7x
topology: tpu7x:2x2x1
jax: 0.10.0
libtpu: 0.0.40
codegen_flags: <defaults>
</compile_context>

<pallas_src>
import jax
import jax.numpy as jnp
from jax.experimental import pallas as pl
from jax.experimental.pallas import tpu as pltpu


def _round_up(a, m):
    return (a + m - 1) // m * m


def _pad_dim(dim, hw):
    # Pad to a hardware granule; dims smaller than the granule stay unpadded
    # (block_shape == full array dim is always legal).
    return dim if dim < hw else _round_up(dim, hw)


def _tile_candidates(padded, hw):
    """Tile sizes that divide `padded` and are multiples of `hw` (or the full dim),
    descending."""
    if padded < hw:
        return [padded]
    cands = {padded}
    t = hw
    while t <= padded:
        if padded % t == 0:
            cands.add(t)
        t += hw
    return sorted(cands, reverse=True)


def _pick_tile(padded, hw, target):
    cands = _tile_candidates(padded, hw)
    for c in cands:
        if c <= target:
            return c
    return cands[-1]


def _dot(x, w):
    # x: (TB, TK) or (EB, TB, TK); w: (TN, TK) or (EB, TN, TK).
    # Contract on K; batch on the leading ensemble-pack dim when present.
    if x.ndim == 2:
        dn = (((1,), (1,)), ((), ()))
    else:
        dn = (((2,), (2,)), ((0,), (0,)))
    return jax.lax.dot_general(x, w, dimension_numbers=dn,
                               preferred_element_type=jnp.float32)


def _single_k_kernel(x_ref, w_ref, b_ref, o_ref):
    # One K step: dot + bias + cast straight into the output block (no scratch).
    acc = _dot(x_ref[...], w_ref[...])
    o_ref[...] = (acc + b_ref[...].astype(jnp.float32)).astype(o_ref.dtype)


def _multi_k_kernel(x_ref, w_ref, b_ref, o_ref, acc_ref):
    k = pl.program_id(3)

    @pl.when(k == 0)
    def _():
        acc_ref[...] = jnp.zeros_like(acc_ref)

    acc_ref[...] += _dot(x_ref[...], w_ref[...])

    @pl.when(k == pl.num_programs(3) - 1)
    def _():
        o_ref[...] = (acc_ref[...] + b_ref[...].astype(jnp.float32)).astype(o_ref.dtype)


def batched_linear(x, weight, bias=None, *, compute_dtype=None,
                   block_b=None, block_n=256, block_k=None):
    """x: (E, B, K), weight: (E, N, K), bias: (E, N) -> (E, B, N).

    compute_dtype: dtype used for the MXU operands (e.g. jnp.bfloat16). None keeps
    the input dtype (exact semantics). Accumulation and bias add are always f32.
    """
    E, B, K = x.shape
    Ew, N, Kw = weight.shape
    assert Ew == E and Kw == K, "weight must be (E, out_features, in_features)"

    out_dtype = x.dtype
    if bias is None:
        bias = jnp.zeros((E, N), dtype=out_dtype)
    assert bias.shape == (E, N)

    if compute_dtype is None:
        compute_dtype = x.dtype
    compute_dtype = jnp.dtype(compute_dtype)
    cdt = compute_dtype.itemsize
    odt = jnp.dtype(out_dtype).itemsize
    bdt = jnp.dtype(bias.dtype).itemsize

    # ---- pad only to hardware granules (8 sublane / 128 lane) ----
    Bp = _pad_dim(B, 8)
    Np = _pad_dim(N, 128)
    Kp = _pad_dim(K, 128)

    # ---- tile selection (tiles are exact divisors of the padded dims) ----
    if block_k is None:
        block_k = 1024 if cdt <= 2 else 512   # deeper K tile in bf16
    tn = _pick_tile(Np, 128, block_n)
    tk = _pick_tile(Kp, 128, block_k)
    nt = Np // tn
    kt = Kp // tk

    # B tile: as large as the double-buffered working set allows (weight panel is then
    # streamed from HBM only Bp/tb times; tb == Bp => exactly once).
    vmem_budget = 20 * 1024 * 1024
    b_cands = _tile_candidates(Bp, 8)
    if block_b is not None:
        b_cands = [c for c in b_cands if c <= block_b] or [b_cands[-1]]
    tb = b_cands[-1]
    for cand in b_cands:                       # descending: largest that fits
        fp = (2 * (cand * tk * cdt + tn * tk * cdt + tn * bdt + cand * tn * odt)
              + (cand * tn * 4 if kt > 1 else 0))
        if fp <= vmem_budget:
            tb = cand
            break
    bt = Bp // tb

    # ---- pack several small ensemble members per grid step (amortize ~0.35us/step) ----
    eb = 1
    if nt == 1 and bt == 1 and kt == 1 and E > 1:
        # Footprint includes double buffering of all operands + output.
        per_member = 2 * (tb * tk * cdt + tn * tk * cdt + tn * bdt + tb * tn * odt)
        pack_budget = 6 * 1024 * 1024          # conservative for v5e's 16 MiB scoped VMEM
        cap = max(1, pack_budget // max(per_member, 1))
        cap = min(cap, max(1, E // 2))         # keep >=2 parallel steps for v7x's 2 TCs
        for d in range(1, E + 1):
            if E % d == 0 and d <= cap:
                eb = d

    # ---- wrapper-side padding / dtype cast (skipped entirely when not needed) ----
    xp = x if (Bp == B and Kp == K) else jnp.pad(x, ((0, 0), (0, Bp - B), (0, Kp - K)))
    wp = weight if (Np == N and Kp == K) else jnp.pad(weight, ((0, 0), (0, Np - N), (0, Kp - K)))
    bp = bias if Np == N else jnp.pad(bias, ((0, 0), (0, Np - N)))
    bp = bp.reshape(E, 1, Np)
    if xp.dtype != compute_dtype:
        xp = xp.astype(compute_dtype)
    if wp.dtype != compute_dtype:
        wp = wp.astype(compute_dtype)
    # TODO(synk): benchmark a pre-transposed weight layout (E, K, N) with
    # dimension_numbers contracting ((2,),(1,)) — biggest potential win on v5e.

    grid = (E // eb, nt, bt, kt)
    lead = (pl.Squeezed(),) if eb == 1 else (eb,)   # 2-D kernel refs when eb == 1

    x_spec = pl.BlockSpec(lead + (tb, tk), lambda e, n, b, k: (e, b, k))
    w_spec = pl.BlockSpec(lead + (tn, tk), lambda e, n, b, k: (e, n, k))
    b_spec = pl.BlockSpec(lead + (1, tn), lambda e, n, b, k: (e, 0, n))
    o_spec = pl.BlockSpec(lead + (tb, tn), lambda e, n, b, k: (e, b, n))

    if kt == 1:
        kernel = _single_k_kernel
        scratch = []
    else:
        kernel = _multi_k_kernel
        acc_shape = (tb, tn) if eb == 1 else (eb, tb, tn)
        scratch = [pltpu.VMEM(acc_shape, jnp.float32)]

    # Explicit scoped-VMEM limit derived from the double-buffered footprint; capped
    # well under v7x's 64 MiB physical VMEM, floored above v5e's 16 MiB default.
    footprint = (2 * eb * (tb * tk * cdt + tn * tk * cdt + tn * bdt + tb * tn * odt)
                 + (eb * tb * tn * 4 if kt > 1 else 0))
    vmem_limit = int(min(max(int(1.5 * footprint) + (4 << 20), 24 << 20), 56 << 20))

    # Honest bytes: x is re-streamed once per N tile; the weight K panel is re-streamed
    # once per B tile (except kt == 1, where the constant block index elides the DMA).
    x_streams = nt
    w_streams = bt if kt > 1 else 1
    cost = pl.CostEstimate(
        flops=2 * E * Bp * Np * Kp,
        transcendentals=0,
        bytes_accessed=int(E * (Bp * Kp * cdt * x_streams
                                + Np * Kp * cdt * w_streams
                                + Bp * Np * odt
                                + Np * bdt)),
    )

    out = pl.pallas_call(
        kernel,
        out_shape=jax.ShapeDtypeStruct((E, Bp, Np), out_dtype),
        grid_spec=pltpu.PrefetchScalarGridSpec(
            num_scalar_prefetch=0,
            grid=grid,
            in_specs=[x_spec, w_spec, b_spec],
            out_specs=o_spec,
            scratch_shapes=scratch,
        ),
        compiler_params=pltpu.CompilerParams(
            dimension_semantics=("parallel", "parallel", "parallel", "arbitrary"),
            vmem_limit_bytes=vmem_limit,
        ),
        cost_estimate=cost,
    )(xp, wp, bp)

    if Bp != B or Np != N:
        out = out[:, :B, :N]
    return out


if __name__ == "__main__":
    # --- Test 1: small shapes consistent with the module (ensemble=4, batch=8, in=32, out=32)
    E, B, K, N = 4, 8, 32, 32
    key = jax.random.PRNGKey(0)
    kx, kw, kb = jax.random.split(key, 3)

    # nn.Linear.reset_parameters-style init: U(-1/sqrt(in), 1/sqrt(in)).
    bound = 1.0 / jnp.sqrt(jnp.float32(K))
    x = jax.random.normal(kx, (E, B, K), dtype=jnp.float32)
    weight = jax.random.uniform(kw, (E, N, K), dtype=jnp.float32,
                                minval=-bound, maxval=bound)
    bias = jax.random.uniform(kb, (E, N), dtype=jnp.float32,
                              minval=-bound, maxval=bound)

    ref = jnp.einsum("ebk,enk->ebn", x, weight) + bias[:, None, :]

    out = jax.block_until_ready(batched_linear(x, weight, bias))
    assert out.shape == (E, B, N)
    assert jnp.allclose(out, ref, atol=1e-5, rtol=1e-5), "f32 mismatch vs reference"

    # bf16 MXU-operand path (f32 accumulate + f32 bias add), looser tolerance.
    out_bf = jax.block_until_ready(
        batched_linear(x, weight, bias, compute_dtype=jnp.bfloat16))
    assert jnp.allclose(out_bf, ref, atol=5e-2, rtol=5e-2), "bf16 mismatch vs reference"

    # --- Test 2: exercises N padding (192 -> 256), the squeezed eb==1 path and the
    # multi-K-step accumulator path (block_k=128 forces 2 K steps).
    E2, B2, K2, N2 = 2, 40, 256, 192
    k1, k2, k3 = jax.random.split(jax.random.PRNGKey(1), 3)
    bound2 = 1.0 / jnp.sqrt(jnp.float32(K2))
    x2 = jax.random.normal(k1, (E2, B2, K2), dtype=jnp.float32)
    w2 = jax.random.uniform(k2, (E2, N2, K2), dtype=jnp.float32,
                            minval=-bound2, maxval=bound2)
    b2 = jax.random.uniform(k3, (E2, N2), dtype=jnp.float32,
                            minval=-bound2, maxval=bound2)
    out2 = jax.block_until_ready(batched_linear(x2, w2, b2, block_k=128))
    ref2 = jnp.einsum("ebk,enk->ebn", x2, w2) + b2[:, None, :]
    assert out2.shape == (E2, B2, N2)
    assert jnp.allclose(out2, ref2, atol=1e-2, rtol=1e-2), "tiled-path mismatch"

    print("KERNEL_OK")
</pallas_src>

<mosaic_0001>
module attributes {stable_mosaic.version = 11 : i64} {
  func.func @_single_k_kernel(%arg0: i32, %arg1: i32, %arg2: i32, %arg3: i32, %arg4: memref<2x8x32xf32, #tpu.memory_space<vmem>>, %arg5: memref<2x32x32xf32, #tpu.memory_space<vmem>>, %arg6: memref<2x1x32xf32, #tpu.memory_space<vmem>>, %arg7: memref<2x8x32xf32, #tpu.memory_space<vmem>>) attributes {dimension_semantics = [#tpu.dimension_semantics<parallel>, #tpu.dimension_semantics<parallel>, #tpu.dimension_semantics<parallel>, #tpu.dimension_semantics<arbitrary>], iteration_bounds = array<i64: 2, 1, 1, 1>, scalar_prefetch = 0 : i64, scratch_operands = 0 : i64, tpu.core_type = #tpu.core_type<tc>, window_params = [{transform_indices = @transform_0, window_bounds = array<i64: 2, 8, 32>}, {transform_indices = @transform_1, window_bounds = array<i64: 2, 32, 32>}, {transform_indices = @transform_2, window_bounds = array<i64: 2, 1, 32>}, {transform_indices = @transform_3, window_bounds = array<i64: 2, 8, 32>}]} {
    %c0 = arith.constant 0 : index
    %c0_0 = arith.constant 0 : index
    %c0_1 = arith.constant 0 : index
    %0 = vector.load %arg4[%c0, %c0_0, %c0_1] : memref<2x8x32xf32, #tpu.memory_space<vmem>>, vector<2x8x32xf32>
    %c0_2 = arith.constant 0 : index
    %c0_3 = arith.constant 0 : index
    %c0_4 = arith.constant 0 : index
    %1 = vector.load %arg5[%c0_2, %c0_3, %c0_4] : memref<2x32x32xf32, #tpu.memory_space<vmem>>, vector<2x32x32xf32>
    %cst = arith.constant dense<0.000000e+00> : vector<2x8x32xf32>
    %2 = tpu.matmul %0, %1, %cst {dimension_numbers = #tpu.dot_dimension_numbers<[2], [2], [1], [1], [0, 0, 0, 1, 1, 1], [0], [0]>} : vector<2x8x32xf32>, vector<2x32x32xf32>, vector<2x8x32xf32> -> vector<2x8x32xf32>
    %c0_5 = arith.constant 0 : index
    %c0_6 = arith.constant 0 : index
    %c0_7 = arith.constant 0 : index
    %3 = vector.load %arg6[%c0_5, %c0_6, %c0_7] : memref<2x1x32xf32, #tpu.memory_space<vmem>>, vector<2x1x32xf32>
    %4 = vector.broadcast %3 : vector<2x1x32xf32> to vector<2x8x32xf32>
    %5 = arith.addf %2, %4 : vector<2x8x32xf32>
    %c0_8 = arith.constant 0 : index
    %c0_9 = arith.constant 0 : index
    %c0_10 = arith.constant 0 : index
    %6 = vector.load %arg7[%c0_8, %c0_9, %c0_10] : memref<2x8x32xf32, #tpu.memory_space<vmem>>, vector<2x8x32xf32>
    tpu.vector_store %arg7[%c0_8, %c0_9, %c0_10], %5 {strides = array<i32>} : memref<2x8x32xf32, #tpu.memory_space<vmem>>, vector<2x8x32xf32>,
    return
  }
  func.func @transform_0(%arg0: i32, %arg1: i32, %arg2: i32, %arg3: i32) -> (i32, i32, i32) {
    %c0_i32 = arith.constant 0 : i32
    return %arg0, %arg2, %arg3 : i32, i32, i32
  }
  func.func @transform_1(%arg0: i32, %arg1: i32, %arg2: i32, %arg3: i32) -> (i32, i32, i32) {
    %c0_i32 = arith.constant 0 : i32
    return %arg0, %arg1, %arg3 : i32, i32, i32
  }
  func.func @transform_2(%arg0: i32, %arg1: i32, %arg2: i32, %arg3: i32) -> (i32, i32, i32) {
    %c0_i32 = arith.constant 0 : i32
    %c0_i32_0 = arith.constant 0 : i32
    return %arg0, %c0_i32, %arg1 : i32, i32, i32
  }
  func.func @transform_3(%arg0: i32, %arg1: i32, %arg2: i32, %arg3: i32) -> (i32, i32, i32) {
    %c0_i32 = arith.constant 0 : i32
    return %arg0, %arg2, %arg1 : i32, i32, i32
  }
}

</mosaic_0001>

<llo_original>
// kernel: tpu_custom_call.1
$region0: #{tpu_custom_call.1}
  #allocation0 [shape = 'u32[]', space=smem, size = 0x4, offset = 0x4, fixed_abs, tag = 'smem constant byte address 0x4 - core index']
  #allocation1 [shape = 'u32[144,128]{1,0:T(1,128)}', space=vmem, size = 0x12000, scoped, tag = 'internal scratch']
  %s0 = inlined_call_operand.hbm [shape: f32[4,8,32], index: 0, kind: input, shape index: {}]
  %s1 = inlined_call_operand.hbm [shape: f32[4,32,32], index: 1, kind: input, shape index: {}]
  %s2 = inlined_call_operand.vmem [shape: f32[4,1,32], index: 2, kind: input, shape index: {}]
  %s3 = inlined_call_operand.hbm [shape: f32[4,8,32], index: 3, kind: output, shape index: {}]
  %s4 = sld [smem:[#allocation0]]
  $region53: #{tpu_custom_call.1} parent=0
    _
  %s6 = ssub.s32 1, %s4
  %s7 = scalar_select 0, %s6, %s4
  $region1: #{tpu_custom_call.1} parent=0
    #allocation2 [shape = 'u8[16384]{0}', space=vmem, size = 0x4000, scoped, tag = 'input window, operand 0']
    #allocation3 [shape = 's32[2]{0}', space=sflag, size = 0x8, scoped, tag = 'scoped memory for tpu_custom_call.1']
    #allocation4 [shape = 's32[2]{0}', space=sflag, size = 0x8, scoped, tag = 'scoped memory for tpu_custom_call.1']
    #allocation5 [shape = 'u8[65536]{0}', space=vmem, size = 0x10000, scoped, tag = 'input window, operand 1']
    #allocation6 [shape = 's32[2]{0}', space=sflag, size = 0x8, scoped, tag = 'scoped memory for tpu_custom_call.1']
    #allocation7 [shape = 'u8[16384]{0}', space=vmem, size = 0x4000, scoped, tag = 'output window, operand 0']
    %8 = vsyncpa [#allocation3], 0
    %s9 = scalar_lea.sflag [#allocation3], 1
    %10 = vsyncpa %s9, 0
    %11 = vsyncpa [#allocation6], 0
    %s12 = scalar_lea.sflag [#allocation6], 1
    %13 = vsyncpa %s12, 0
    %14 = vsyncpa [#allocation4], 0
    %s15 = scalar_lea.sflag [#allocation4], 1
    %16 = vsyncpa %s15, 0
    loop: start=0, step=1, limit=4
    $region2: #{tpu_custom_call.1} parent=1 // loop_pre_header
      _
    $region3: #{tpu_custom_call.1} parent=1 // loop_header
      %s18 = sphi 0, %s22
      %p19 = scmp.ge.s32.totalorder %s18, 4
      %s25 = sphi 0, %s51
      %s26 = sphi 0, %s47
      %s27 = sphi 0, %s43
      %s28 = sphi 0, %s39
      %s29 = sphi 0, %s25
      %s30 = sphi 0, %s26
      %s31 = sphi 0, %s27
      %s32 = sphi 0, %s28
      %s33 = sphi 0, %s29
      %s34 = sphi 0, %s30
      %s35 = sphi 0, %s31
      %s36 = sphi 0, %s32
      %s58 = sphi 0, %s60
      %s61 = sphi 0, %s58
      %s62 = sphi 0, %s61
      %s78 = sphi 0, %s62
      %s88 = sphi 0, %s90
      %s91 = sphi 0, %s88
      %s92 = sphi 0, %s91
      %s108 = sphi 0, %s92
      %s116 = sphi 0, %s118
      %s119 = sphi 0, %s116
      %s120 = sphi 0, %s119
      %s136 = sphi 0, %s120
      %s146 = sphi 0, %s148
      %s149 = sphi 0, %s146
      %s150 = sphi 0, %s149
      %s166 = sphi 0, %s150
    $region4: #{tpu_custom_call.1} parent=1 // loop_header_branch
      %21 = sbr.rel (%p19) target = $region8
    $region5: #{tpu_custom_call.1} parent=1 // loop_body
      %s23 = ssub.s32 %s18, 1
      %s24 = ssub.s32 %s18, 2
      %s37 = sadd.s32 1, %s28
      %p38 = scmp.ge.s32.totalorder %s37, 1
      %s39 = scalar_select %p38, 0, %s37
      %s40 = sadd.s32 1, %s27
      %s41 = scalar_select %p38, %s40, %s27
      %p42 = scmp.ge.s32.totalorder %s41, 1
      %s43 = scalar_select %p42, 0, %s41
      %s44 = sadd.s32 1, %s26
      %s45 = scalar_select %p42, %s44, %s26
      %p46 = scmp.ge.s32.totalorder %s45, 1
      %s47 = scalar_select %p46, 0, %s45
      %s48 = sadd.s32 1, %s25
      %s49 = scalar_select %p46, %s48, %s25
      %p50 = scmp.ge.s32.totalorder %s49, 2
      %s51 = scalar_select %p50, 0, %s49
      %s52 = ssub.s32 %s25, %s51
      %s53 = ssub.s32 %s27, %s43
      %s54 = sor.u32 %s52, %s53
      %s55 = ssub.s32 %s28, %s39
      %s56 = sor.u32 %s54, %s55
      %p57 = scmp.eq.s32.totalorder %s56, 0
      %s59 = sadd.s32 %s58, 1
      %s60 = scalar_select %p57, %s58, %s59
      %p63 = pneg %p57
      %p64 = scmp.eq.s32.totalorder %s18, 1
      %p65 = por %p63, %p64
      %p66 = scmp.ne.s32.totalorder %s58, %s61
      %p67 = scmp.eq.s32.totalorder %s18, 0
      %p68 = por %p66, %p67
      %p69 = scmp.ne.s32.totalorder %s58, %s61
      %p70 = scmp.eq.s32.totalorder %s23, 1
      %p71 = por %p69, %p70
      %p72 = scmp.ne.s32.totalorder %s61, %s62
      %p73 = scmp.eq.s32.totalorder %s23, 0
      %p74 = por %p72, %p73
      %p75 = scmp.ne.s32.totalorder %s61, %s62
      %p76 = scmp.eq.s32.totalorder %s24, 1
      %p77 = por %p75, %p76
      %p79 = scmp.ne.s32.totalorder %s62, %s78
      %p80 = scmp.eq.s32.totalorder %s24, 0
      %p81 = por %p79, %p80
      %s82 = ssub.s32 %s25, %s51
      %s83 = ssub.s32 %s26, %s47
      %s84 = sor.u32 %s82, %s83
      %s85 = ssub.s32 %s28, %s39
      %s86 = sor.u32 %s84, %s85
      %p87 = scmp.eq.s32.totalorder %s86, 0
      %s89 = sadd.s32 %s88, 1
      %s90 = scalar_select %p87, %s88, %s89
      %p93 = pneg %p87
      %p94 = scmp.eq.s32.totalorder %s18, 1
      %p95 = por %p93, %p94
      %p96 = scmp.ne.s32.totalorder %s88, %s91
      %p97 = scmp.eq.s32.totalorder %s18, 0
      %p98 = por %p96, %p97
      %p99 = scmp.ne.s32.totalorder %s88, %s91
      %p100 = scmp.eq.s32.totalorder %s23, 1
      %p101 = por %p99, %p100
      %p102 = scmp.ne.s32.totalorder %s91, %s92
      %p103 = scmp.eq.s32.totalorder %s23, 0
      %p104 = por %p102, %p103
      %p105 = scmp.ne.s32.totalorder %s91, %s92
      %p106 = scmp.eq.s32.totalorder %s24, 1
      %p107 = por %p105, %p106
      %p109 = scmp.ne.s32.totalorder %s92, %s108
      %p110 = scmp.eq.s32.totalorder %s24, 0
      %p111 = por %p109, %p110
      %s112 = ssub.s32 %s25, %s51
      %s113 = ssub.s32 %s26, %s47
      %s114 = sor.u32 %s112, %s113
      %p115 = scmp.eq.s32.totalorder %s114, 0
      %s117 = sadd.s32 %s116, 1
      %s118 = scalar_select %p115, %s116, %s117
      %p121 = pneg %p115
      %p122 = scmp.eq.s32.totalorder %s18, 1
      %p123 = por %p121, %p122
      %p124 = scmp.ne.s32.totalorder %s116, %s119
      %p125 = scmp.eq.s32.totalorder %s18, 0
      %p126 = por %p124, %p125
      %p127 = scmp.ne.s32.totalorder %s116, %s119
      %p128 = scmp.eq.s32.totalorder %s23, 1
      %p129 = por %p127, %p128
      %p130 = scmp.ne.s32.totalorder %s119, %s120
      %p131 = scmp.eq.s32.totalorder %s23, 0
      %p132 = por %p130, %p131
      %p133 = scmp.ne.s32.totalorder %s119, %s120
      %p134 = scmp.eq.s32.totalorder %s24, 1
      %p135 = por %p133, %p134
      %p137 = scmp.ne.s32.totalorder %s120, %s136
      %p138 = scmp.eq.s32.totalorder %s24, 0
      %p139 = por %p137, %p138
      %s140 = ssub.s32 %s25, %s51
      %s141 = ssub.s32 %s27, %s43
      %s142 = sor.u32 %s140, %s141
      %s143 = ssub.s32 %s26, %s47
      %s144 = sor.u32 %s142, %s143
      %p145 = scmp.eq.s32.totalorder %s144, 0
      %s147 = sadd.s32 %s146, 1
      %s148 = scalar_select %p145, %s146, %s147
      %p151 = pneg %p145
      %p152 = scmp.eq.s32.totalorder %s18, 1
      %p153 = por %p151, %p152
      %p154 = scmp.ne.s32.totalorder %s146, %s149
      %p155 = scmp.eq.s32.totalorder %s18, 0
      %p156 = por %p154, %p155
      %p157 = scmp.ne.s32.totalorder %s146, %s149
      %p158 = scmp.eq.s32.totalorder %s23, 1
      %p159 = por %p157, %p158
      %p160 = scmp.ne.s32.totalorder %s149, %s150
      %p161 = scmp.eq.s32.totalorder %s23, 0
      %p162 = por %p160, %p161
      %p163 = scmp.ne.s32.totalorder %s149, %s150
      %p164 = scmp.eq.s32.totalorder %s24, 1
      %p165 = por %p163, %p164
      %p167 = scmp.ne.s32.totalorder %s150, %s166
      %p168 = scmp.eq.s32.totalorder %s24, 0
      %p169 = por %p167, %p168
      %p170 = scmp.le.s32.totalorder 1, %s18
      %p171 = scmp.lt.s32.totalorder %s18, 3
      %p172 = pnand %p170, %p171
      %p173 = pneg %p172
      // Predicated region
      $region9: #{tpu_custom_call.1} parent=5 // pred_check
        _
      $region10: #{tpu_custom_call.1} parent=5 // pred_check_branch
        %175 = sbr.rel (%p172) target = $region12
      $region11: #{tpu_custom_call.1} parent=5 // pred_region
        %s176 = ssub.s32 %s18, 1
      $region12: #{tpu_custom_call.1} parent=5 // pred_fallthru
        _
      %p177 = scmp.lt.s32.totalorder %s18, 2
      // Predicated region
      $region13: #{tpu_custom_call.1} parent=5 // pred_check
        %p178 = pneg %p177
      $region14: #{tpu_custom_call.1} parent=5 // pred_check_branch
        %180 = sbr.rel (%p178) target = $region16
      $region15: #{tpu_custom_call.1} parent=5 // pred_region
        // Predicated region
        $region17: #{tpu_custom_call.1} parent=15 // pred_check
          %p181 = pneg %p68
        $region18: #{tpu_custom_call.1} parent=15 // pred_check_branch
          %183 = sbr.rel (%p181) target = $region20
        $region19: #{tpu_custom_call.1} parent=15 // pred_region
          %s184 = sand.u32 %s58, 1
          %s185 = scalar_lea.sflag [#allocation3], %s184
          %s186 = sand.u32 %s58, 1
          %s187 = smul.addr %s186, 16
          %s188 = scalar_lea.vmem [#allocation2], %s187
          %s189 = smul.u32 2, %s25
          %s191 = ssub.s32 256, 256
          %192 = vsyncadd %s185, %s191
          %s193 = sadd.s32 %s28, %s27
          %s194 = sadd.s32 %s193, %s189
          %s195 = smul.addr %s194, 128
          %s196 = scalar_lea.hbm %s0, %s195
          %s197 = sshll.u32 %s188, 4
          %s198 = int_to_ptr.vmem [resolvable:$true] %s197
          %203 = dma.hbm_to_vmem [thread:$0]  %s196, 256, %s198, %s185, 128, 128, 8
        $region20: #{tpu_custom_call.1} parent=15 // pred_fallthru
          _
        // Predicated region
        $region21: #{tpu_custom_call.1} parent=15 // pred_check
          %p204 = pneg %p98
        $region22: #{tpu_custom_call.1} parent=15 // pred_check_branch
          %206 = sbr.rel (%p204) target = $region24
        $region23: #{tpu_custom_call.1} parent=15 // pred_region
          %s207 = sand.u32 %s88, 1
          %s208 = scalar_lea.sflag [#allocation6], %s207
          %s209 = sand.u32 %s88, 1
          %s210 = smul.addr %s209, 64
          %s211 = scalar_lea.vmem [#allocation5], %s210
          %s212 = smul.u32 2, %s25
          %s213 = smul.u32 4, %s26
          %s215 = ssub.s32 1024, 1024
          %216 = vsyncadd %s208, %s215
          %s217 = sadd.s32 %s28, %s213
          %s218 = smul.addr %s212, 4
          %s219 = sadd.s32 %s217, %s218
          %s220 = smul.addr %s219, 128
          %s221 = scalar_lea.hbm %s1, %s220
          %s222 = sshll.u32 %s211, 4
          %s223 = int_to_ptr.vmem [resolvable:$true] %s222
          %228 = dma.hbm_to_vmem [thread:$0]  %s221, 1024, %s223, %s208, 128, 128, 8
        $region24: #{tpu_custom_call.1} parent=15 // pred_fallthru
          _
        // Predicated region
        $region25: #{tpu_custom_call.1} parent=15 // pred_check
          %p229 = pneg %p126
        $region26: #{tpu_custom_call.1} parent=15 // pred_check_branch
          %231 = sbr.rel (%p229) target = $region28
        $region27: #{tpu_custom_call.1} parent=15 // pred_region
          %s232 = smul.u32 2, %s25
          %p233 = scmp.lt.s32.totalorder %s232, 3
          %s234 = scalar_select %p233, %s232, 3
          %p235 = scmp.lt.s32.totalorder %s26, 0
          %s236 = scalar_select %p235, %s26, 0
          %s237 = sadd.s32 %s236, %s234
          %s238 = scalar_lea.vmem %s2, %s237
          %s239 = smul.u32 2, %s25
        $region28: #{tpu_custom_call.1} parent=15 // pred_fallthru
          _
      $region16: #{tpu_custom_call.1} parent=5 // pred_fallthru
        _
      %p240 = scmp.le.s32.totalorder 1, %s18
      %p241 = scmp.lt.s32.totalorder %s18, 3
      %p242 = pnand %p240, %p241
      %p243 = pneg %p242
      // Predicated region
      $region29: #{tpu_custom_call.1} parent=5 // pred_check
        _
      $region30: #{tpu_custom_call.1} parent=5 // pred_check_branch
        %245 = sbr.rel (%p242) target = $region32
      $region31: #{tpu_custom_call.1} parent=5 // pred_region
        %s246 = ssub.s32 %s18, 1
        %s247 = sand.u32 %s61, 1
        %s248 = scalar_lea.sflag [#allocation3], %s247
        %s249 = sand.u32 %s61, 1
        %s250 = smul.addr %s249, 16
        %s251 = scalar_lea.vmem [#allocation2], %s250
        // Predicated region
        $region33: #{tpu_custom_call.1} parent=31 // pred_check
          %p252 = pneg %p74
        $region34: #{tpu_custom_call.1} parent=31 // pred_check_branch
          %254 = sbr.rel (%p252) target = $region36
        $region35: #{tpu_custom_call.1} parent=31 // pred_region
          %255 = dma.done %s248, 256
        $region36: #{tpu_custom_call.1} parent=31 // pred_fallthru
          _
        %s256 = sand.u32 %s91, 1
        %s257 = scalar_lea.sflag [#allocation6], %s256
        %s258 = sand.u32 %s91, 1
        %s259 = smul.addr %s258, 64
        %s260 = scalar_lea.vmem [#allocation5], %s259
        // Predicated region
        $region37: #{tpu_custom_call.1} parent=31 // pred_check
          %p261 = pneg %p104
        $region38: #{tpu_custom_call.1} parent=31 // pred_check_branch
          %263 = sbr.rel (%p261) target = $region40
        $region39: #{tpu_custom_call.1} parent=31 // pred_region
          %264 = dma.done %s257, 1024
        $region40: #{tpu_custom_call.1} parent=31 // pred_fallthru
          _
        %s265 = sand.u32 %s61, 1
        %s266 = scalar_lea.sflag [#allocation3], %s265
        %s267 = sand.u32 %s61, 1
        %s268 = smul.addr %s267, 16
        %s269 = scalar_lea.vmem [#allocation2], %s268
        %p270 = pneg %p74
        %p271 = pneg %p71
        %s272 = sand.u32 %s91, 1
        %s273 = scalar_lea.sflag [#allocation6], %s272
        %s274 = sand.u32 %s91, 1
        %s275 = smul.addr %s274, 64
        %s276 = scalar_lea.vmem [#allocation5], %s275
        %p277 = pneg %p104
        %p278 = pneg %p101
        %s279 = smul.u32 2, %s29
        %p280 = scmp.lt.s32.totalorder %s279, 3
        %s281 = scalar_select %p280, %s279, 3
        %p282 = scmp.lt.s32.totalorder %s30, 0
        %s283 = scalar_select %p282, %s30, 0
        %s284 = sadd.s32 %s283, %s281
        %s285 = scalar_lea.vmem %s2, %s284
        %p286 = pneg %p132
        %p287 = pneg %p129
        %p288 = pneg %p162
        %p289 = pneg %p159
        %s290 = sand.u32 %s149, 1
        %s291 = scalar_lea.sflag [#allocation4], %s290
        %s292 = sand.u32 %s149, 1
        %s293 = smul.addr %s292, 16
        %s294 = scalar_lea.vmem [#allocation7], %s293
        %s295 = smul.u32 2, %s29
        %s296 = smul.u32 2, %s29
        %s297 = smul.u32 4, %s30
        %s298 = smul.u32 2, %s29
        %p299 = scmp.lt.s32.totalorder %s298, 3
        %s300 = scalar_select %p299, %s298, 3
        %p301 = scmp.lt.s32.totalorder %s30, 0
        %s302 = scalar_select %p301, %s30, 0
        %s303 = sadd.s32 %s302, %s300
        %s304 = scalar_lea.vmem %s2, %s303
        %s305 = smul.u32 2, %s29
        %s306 = smul.u32 2, %s29
        %v307 = vld [vmem:[%s251] sm:$0xff]
        %v308 = vld [vmem:[%s251 + $0x8] sm:$0xff]
        %v309 = vld [vmem:[%s260] sm:$0xff]
        %v310 = vld [vmem:[%s260 + $0x8] sm:$0xff]
        %v311 = vld [vmem:[%s260 + $0x10] sm:$0xff]
        %v312 = vld [vmem:[%s260 + $0x18] sm:$0xff]
        %v313 = vld [vmem:[%s260 + $0x20] sm:$0xff]
        %v314 = vld [vmem:[%s260 + $0x28] sm:$0xff]
        %v315 = vld [vmem:[%s260 + $0x30] sm:$0xff]
        %v316 = vld [vmem:[%s260 + $0x38] sm:$0xff]
        %v317 = vld [vmem:[%s304] sm:$0x1]
        %v318 = vld [vmem:[%s304 + $0x1] sm:$0x1]
        %v321 = vlaneseq
        %v322 = vshrl.u32 %v321, 7
        %v323 = vsub.s32 0, %v322
        %v324 = vrot.slane %v317, %v323
        %v325 = vlaneseq
        %v326 = vshrl.u32 %v325, 7
        %v327 = vsub.s32 0, %v326
        %v328 = vrot.slane %v318, %v327
        %vm331 = vcmask 261120
        %v333 = vsel %vm331, %v307, 0
        %v336 = vsel %vm331, %v309, 0
        %v339 = vsel %vm331, %v310, 0
        %v342 = vsel %vm331, %v311, 0
        %v345 = vsel %vm331, %v312, 0
        %347 = vmatprep.subr.mxu0 0.0
        %348 = vmatpush1.xpose.msra.mxu0 %v336
        %349 = vmatprep.subr.mxu0 0.0
        %350 = vmatpush1.xpose.msra.mxu0 %v339
        %351 = vmatprep.subr.mxu0 0.0
        %352 = vmatpush1.xpose.msra.mxu0 %v342
        %353 = vmatprep.subr.mxu0 0.0
        %354 = vmatpush1.xpose.msra.mxu0 %v345
        %355 = vmatprep.subr.mxu0 0.0
        %356 = vmatpush1.xpose.msra.mxu0 0.0
        %357 = vmatprep.subr.mxu0 0.0
        %358 = vmatpush1.xpose.msra.mxu0 0.0
        %359 = vmatprep.subr.mxu0 0.0
        %360 = vmatpush1.xpose.msra.mxu0 0.0
        %361 = vmatprep.subr.mxu0 0.0
        %362 = vmatpush1.xpose.msra.mxu0 0.0
        %363 = vmatprep.subr.mxu0 0.0
        %364 = vmatpush1.xpose.msra.mxu0 0.0
        %365 = vmatprep.subr.mxu0 0.0
        %366 = vmatpush1.xpose.msra.mxu0 0.0
        %367 = vmatprep.subr.mxu0 0.0
        %368 = vmatpush1.xpose.msra.mxu0 0.0
        %369 = vmatprep.subr.mxu0 0.0
        %370 = vmatpush1.xpose.msra.mxu0 0.0
        %371 = vmatprep.subr.mxu0 0.0
        %372 = vmatpush1.xpose.msra.mxu0 0.0
        %373 = vmatprep.subr.mxu0 0.0
        %374 = vmatpush1.xpose.msra.mxu0 0.0
        %375 = vmatprep.subr.mxu0 0.0
        %376 = vmatpush1.xpose.msra.mxu0 0.0
        %377 = vmatprep.subr.mxu0 0.0
        %378 = vmatpush1.xpose.msra.mxu0 0.0
        %379 = vmatprep.subr.mxu0 0.0
        %380 = vmatpush1.xpose.msra.mxu0 0.0
        %381 = vmatprep.subr.mxu0 0.0
        %382 = vmatpush1.xpose.msra.mxu0 0.0
        %383 = vmatprep.subr.mxu0 0.0
        %384 = vmatpush1.xpose.msra.mxu0 0.0
        %385 = vmatprep.subr.mxu0 0.0
        %386 = vmatpush1.xpose.msra.mxu0 0.0
        %387 = vmatprep.subr.mxu0 0.0
        %388 = vmatpush1.xpose.msra.mxu0 0.0
        %389 = vmatprep.subr.mxu0 0.0
        %390 = vmatpush1.xpose.msra.mxu0 0.0
        %391 = vmatprep.subr.mxu0 0.0
        %392 = vmatpush1.xpose.msra.mxu0 0.0
        %393 = vmatprep.subr.mxu0 0.0
        %394 = vmatpush1.xpose.msra.mxu0 0.0
        %395 = vmatprep.subr.mxu0 0.0
        %396 = vmatpush1.xpose.msra.mxu0 0.0
        %397 = vmatprep.subr.mxu0 0.0
        %398 = vmatpush1.xpose.msra.mxu0 0.0
        %399 = vmatprep.subr.mxu0 0.0
        %400 = vmatpush1.xpose.msra.mxu0 0.0
        %401 = vmatprep.subr.mxu0 0.0
        %402 = vmatpush1.xpose.msra.mxu0 0.0
        %403 = vmatprep.subr.mxu0 0.0
        %404 = vmatpush1.xpose.msra.mxu0 0.0
        %405 = vmatprep.subr.mxu0 0.0
        %406 = vmatpush1.xpose.msra.mxu0 0.0
        %407 = vmatprep.subr.mxu0 0.0
        %408 = vmatpush1.xpose.msra.mxu0 0.0
        %409 = vmatprep.subr.mxu0 0.0
        %410 = vmatpush1.xpose.msra.mxu0 0.0
        %411 = vmatprep.mubr.f32.mxu0 0.0
        %412 = vmatmul.mubr.f32.gmra.mrb[0].mxu0 %v333
        %v413 = vpop.f32.mrb[0].mxu0
        %v414 = vadd.f32 %v324, %v413
        %v415 = vpop.f32.mrb[0].mxu0
        %416 = vdwg.mxu0
        %v418 = vsel %vm331, %v308, 0
        %v421 = vsel %vm331, %v313, 0
        %v424 = vsel %vm331, %v314, 0
        %v427 = vsel %vm331, %v315, 0
        %v430 = vsel %vm331, %v316, 0
        %432 = vmatprep.subr.mxu0 0.0
        %433 = vmatpush1.xpose.msra.mxu0 %v421
        %434 = vmatprep.subr.mxu0 0.0
        %435 = vmatpush1.xpose.msra.mxu0 %v424
        %436 = vmatprep.subr.mxu0 0.0
        %437 = vmatpush1.xpose.msra.mxu0 %v427
        %438 = vmatprep.subr.mxu0 0.0
        %439 = vmatpush1.xpose.msra.mxu0 %v430
        %440 = vmatprep.subr.mxu0 0.0
        %441 = vmatpush1.xpose.msra.mxu0 0.0
        %442 = vmatprep.subr.mxu0 0.0
        %443 = vmatpush1.xpose.msra.mxu0 0.0
        %444 = vmatprep.subr.mxu0 0.0
        %445 = vmatpush1.xpose.msra.mxu0 0.0
        %446 = vmatprep.subr.mxu0 0.0
        %447 = vmatpush1.xpose.msra.mxu0 0.0
        %448 = vmatprep.subr.mxu0 0.0
        %449 = vmatpush1.xpose.msra.mxu0 0.0
        %450 = vmatprep.subr.mxu0 0.0
        %451 = vmatpush1.xpose.msra.mxu0 0.0
        %452 = vmatprep.subr.mxu0 0.0
        %453 = vmatpush1.xpose.msra.mxu0 0.0
        %454 = vmatprep.subr.mxu0 0.0
        %455 = vmatpush1.xpose.msra.mxu0 0.0
        %456 = vmatprep.subr.mxu0 0.0
        %457 = vmatpush1.xpose.msra.mxu0 0.0
        %458 = vmatprep.subr.mxu0 0.0
        %459 = vmatpush1.xpose.msra.mxu0 0.0
        %460 = vmatprep.subr.mxu0 0.0
        %461 = vmatpush1.xpose.msra.mxu0 0.0
        %462 = vmatprep.subr.mxu0 0.0
        %463 = vmatpush1.xpose.msra.mxu0 0.0
        %464 = vmatprep.subr.mxu0 0.0
        %465 = vmatpush1.xpose.msra.mxu0 0.0
        %466 = vmatprep.subr.mxu0 0.0
        %467 = vmatpush1.xpose.msra.mxu0 0.0
        %468 = vmatprep.subr.mxu0 0.0
        %469 = vmatpush1.xpose.msra.mxu0 0.0
        %470 = vmatprep.subr.mxu0 0.0
        %471 = vmatpush1.xpose.msra.mxu0 0.0
        %472 = vmatprep.subr.mxu0 0.0
        %473 = vmatpush1.xpose.msra.mxu0 0.0
        %474 = vmatprep.subr.mxu0 0.0
        %475 = vmatpush1.xpose.msra.mxu0 0.0
        %476 = vmatprep.subr.mxu0 0.0
        %477 = vmatpush1.xpose.msra.mxu0 0.0
        %478 = vmatprep.subr.mxu0 0.0
        %479 = vmatpush1.xpose.msra.mxu0 0.0
        %480 = vmatprep.subr.mxu0 0.0
        %481 = vmatpush1.xpose.msra.mxu0 0.0
        %482 = vmatprep.subr.mxu0 0.0
        %483 = vmatpush1.xpose.msra.mxu0 0.0
        %484 = vmatprep.subr.mxu0 0.0
        %485 = vmatpush1.xpose.msra.mxu0 0.0
        %486 = vmatprep.subr.mxu0 0.0
        %487 = vmatpush1.xpose.msra.mxu0 0.0
        %488 = vmatprep.subr.mxu0 0.0
        %489 = vmatpush1.xpose.msra.mxu0 0.0
        %490 = vmatprep.subr.mxu0 0.0
        %491 = vmatpush1.xpose.msra.mxu0 0.0
        %492 = vmatprep.subr.mxu0 0.0
        %493 = vmatpush1.xpose.msra.mxu0 0.0
        %494 = vmatprep.subr.mxu0 0.0
        %495 = vmatpush1.xpose.msra.mxu0 0.0
        %496 = vmatprep.mubr.f32.mxu0 0.0
        %497 = vmatmul.mubr.f32.gmra.mrb[0].mxu0 %v418
        %v498 = vpop.f32.mrb[0].mxu0
        %v499 = vadd.f32 %v328, %v498
        %v500 = vpop.f32.mrb[0].mxu0
        %501 = vdwg.mxu0
        %502 = vst.msk [vmem:[%s294] sm:$0xff] %vm331, %v414
        %503 = vst.msk [vmem:[%s294 + $0x8] sm:$0xff] %vm331, %v499
        %s504 = sand.u32 %s149, 1
        %s505 = scalar_lea.sflag [#allocation4], %s504
        %s506 = sand.u32 %s149, 1
        %s507 = smul.addr %s506, 16
        %s508 = scalar_lea.vmem [#allocation7], %s507
        // Predicated region
        $region41: #{tpu_custom_call.1} parent=31 // pred_check
          %p509 = pneg %p159
        $region42: #{tpu_custom_call.1} parent=31 // pred_check_branch
          %511 = sbr.rel (%p509) target = $region44
        $region43: #{tpu_custom_call.1} parent=31 // pred_region
          %s512 = smul.u32 2, %s29
          %s514 = ssub.s32 256, 256
          %515 = vsyncadd %s505, %s514
          %s516 = sadd.s32 %s30, %s31
          %s517 = sadd.s32 %s516, %s512
          %s518 = smul.addr %s517, 128
          %s519 = scalar_lea.hbm %s3, %s518
          %s520 = sshll.u32 %s508, 4
          %s521 = int_to_ptr.vmem [resolvable:$true] %s520
          %526 = dma.vmem_to_hbm [thread:$0]  %s521, 256, %s519, %s505, 128, 128, 8
        $region44: #{tpu_custom_call.1} parent=31 // pred_fallthru
          _
      $region32: #{tpu_custom_call.1} parent=5 // pred_fallthru
        _
      %p527 = scmp.le.s32.totalorder 2, %s18
      // Predicated region
      $region45: #{tpu_custom_call.1} parent=5 // pred_check
        %p528 = pneg %p527
      $region46: #{tpu_custom_call.1} parent=5 // pred_check_branch
        %530 = sbr.rel (%p528) target = $region48
      $region47: #{tpu_custom_call.1} parent=5 // pred_region
        %s531 = ssub.s32 %s18, 2
        // Predicated region
        $region49: #{tpu_custom_call.1} parent=47 // pred_check
          %p532 = pneg %p165
        $region50: #{tpu_custom_call.1} parent=47 // pred_check_branch
          %534 = sbr.rel (%p532) target = $region52
        $region51: #{tpu_custom_call.1} parent=47 // pred_region
          %s535 = sand.u32 %s150, 1
          %s536 = scalar_lea.sflag [#allocation4], %s535
          %s537 = sand.u32 %s150, 1
          %s538 = smul.addr %s537, 16
          %s539 = scalar_lea.vmem [#allocation7], %s538
          %540 = dma.done %s536, 256
        $region52: #{tpu_custom_call.1} parent=47 // pred_fallthru
          _
      $region48: #{tpu_custom_call.1} parent=5 // pred_fallthru
        _
    $region6: #{tpu_custom_call.1} parent=1 // loop_footer
      %s22 = sadd.s32 1, %s18
    $region7: #{tpu_custom_call.1} parent=1 // loop_footer_branch
      %17 = sbr.rel target = $region3
    $region8: #{tpu_custom_call.1} parent=1 // loop_exit
      _
    %541 = vsyncpa [#allocation3], 1
    %s542 = scalar_lea.sflag [#allocation3], 1
    %543 = vsyncpa %s542, 1
    %544 = vsyncpa [#allocation6], 1
    %s545 = scalar_lea.sflag [#allocation6], 1
    %546 = vsyncpa %s545, 1
    %547 = vsyncpa [#allocation4], 1
    %s548 = scalar_lea.sflag [#allocation4], 1
    %549 = vsyncpa %s548, 1

</llo_original>
